<compile_context>
chip_gen: v5e
topology: v5e:2x2
jax: 0.10.0
libtpu: 0.0.40
codegen_flags: <defaults>
</compile_context>

<pallas_src>
import jax
import jax.numpy as jnp
from jax.experimental import pallas as pl
from jax.experimental.pallas import tpu as pltpu


def _round_up(v, m):
    return ((v + m - 1) // m) * m


# ------------------------------ fused kernel --------------------------------

def _make_heads_kernel(D, C, S, TB, NOUT_PAD):
    DIRECT = 5 * C + 4          # [linear C | shift 4 | joint 4C] columns
    HS0 = DIRECT                # simclr hidden columns in stage-A output
    HP0 = DIRECT + D            # score  hidden columns in stage-A output
    TAIL = NOUT_PAD - DIRECT - S  # score column + lane padding (>= 1)
    TAKE = min(TAIL, 128)       # take padding straight from the padded score dot

    def kernel(x_ref, wa_ref, ba_ref, ws2_ref, bs2_ref, wp2_ref, bp2_ref,
               wp3_ref, bp3_ref, out_ref):
        x = x_ref[...]                                            # (TB, D) f32
        # Stage A: all heads that read `features`, as one packed matmul.
        a = jnp.dot(x, wa_ref[...],
                    preferred_element_type=jnp.float32) + ba_ref[...]
        direct = a[:, :DIRECT]                    # linear | shift | joint
        h_sim = jnp.maximum(a[:, HS0:HS0 + D], 0.0)
        h_sco = jnp.maximum(a[:, HP0:HP0 + D], 0.0)
        # Stage B: simclr layer 2 and score layer 2 (+ReLU).
        simclr_o = jnp.dot(h_sim, ws2_ref[...],
                           preferred_element_type=jnp.float32) + bs2_ref[...]
        h2 = jnp.maximum(
            jnp.dot(h_sco, wp2_ref[...],
                    preferred_element_type=jnp.float32) + bp2_ref[...], 0.0)
        # Stage C: score layer 3 (lane 0 of the 128-lane-padded weight).
        sc = jnp.dot(h2, wp3_ref[...],
                     preferred_element_type=jnp.float32) + bp3_ref[...]
        pieces = [direct, simclr_o, sc[:, :TAKE]]
        if TAIL > TAKE:
            pieces.append(jnp.zeros((TB, TAIL - TAKE), jnp.float32))
        # Single lane-dense full-width store of all heads.
        out_ref[...] = jnp.concatenate(pieces, axis=-1)           # (TB, NOUT_PAD)

    return kernel


# --------------------------------- wrapper ----------------------------------

def pack_params(raw, D, C, S):
    """Pack torch-layout Linear weights into the kernel's fused layout."""
    DIRECT = 5 * C + 4
    NA = DIRECT + 2 * D
    NA_PAD = _round_up(NA, 128)

    wa = jnp.zeros((D, NA_PAD), jnp.float32)
    ba = jnp.zeros((1, NA_PAD), jnp.float32)

    def put(wa_, ba_, w_pt, b_pt, off, width):
        wa_ = wa_.at[:, off:off + width].set(w_pt.T)
        ba_ = ba_.at[0, off:off + width].set(b_pt)
        return wa_, ba_

    wa, ba = put(wa, ba, raw["w_lin"], raw["b_lin"], 0, C)
    wa, ba = put(wa, ba, raw["w_shift"], raw["b_shift"], C, 4)
    wa, ba = put(wa, ba, raw["w_joint"], raw["b_joint"], C + 4, 4 * C)
    wa, ba = put(wa, ba, raw["w_s1"], raw["b_s1"], DIRECT, D)
    wa, ba = put(wa, ba, raw["w_p1"], raw["b_p1"], DIRECT + D, D)

    wp3 = jnp.zeros((S, 128), jnp.float32).at[:, 0].set(raw["w_p3"][0])
    bp3 = jnp.zeros((1, 128), jnp.float32).at[0, 0].set(raw["b_p3"][0])

    return {
        "wa": wa, "ba": ba,
        "ws2": raw["w_s2"].T.astype(jnp.float32),
        "bs2": raw["b_s2"].reshape(1, S).astype(jnp.float32),
        "wp2": raw["w_p2"].T.astype(jnp.float32),
        "bp2": raw["b_p2"].reshape(1, S).astype(jnp.float32),
        "wp3": wp3, "bp3": bp3,
        "dims": (D, C, S),
    }


def _fused_heads(features, params):
    """One pallas_call computing every head of BaseModel from features."""
    D, C, S = params["dims"]
    B = features.shape[0]
    NA_PAD = params["wa"].shape[1]
    DIRECT = 5 * C + 4
    NOUT_PAD = _round_up(DIRECT + S + 1, 128)

    TB = 128 if B >= 128 else _round_up(max(B, 1), 8)
    B_pad = _round_up(B, TB)
    x = features.astype(jnp.float32)
    if B_pad != B:
        x = jnp.pad(x, ((0, B_pad - B), (0, 0)))

    kernel = _make_heads_kernel(D, C, S, TB, NOUT_PAD)

    bcast = lambda i: (0, 0)
    in_specs = [
        pl.BlockSpec((TB, D), lambda i: (i, 0)),       # features tile
        pl.BlockSpec((D, NA_PAD), bcast),              # packed stage-A weights
        pl.BlockSpec((1, NA_PAD), bcast),              # packed stage-A bias
        pl.BlockSpec((D, S), bcast),                   # simclr layer-2 W
        pl.BlockSpec((1, S), bcast),                   # simclr layer-2 b
        pl.BlockSpec((D, S), bcast),                   # score  layer-2 W
        pl.BlockSpec((1, S), bcast),                   # score  layer-2 b
        pl.BlockSpec((S, 128), bcast),                 # score  layer-3 W (padded)
        pl.BlockSpec((1, 128), bcast),                 # score  layer-3 b (padded)
    ]
    out_spec = pl.BlockSpec((TB, NOUT_PAD), lambda i: (i, 0))

    flops = int(2 * B_pad * (D * NA_PAD + 2 * D * S + S * 128))
    bytes_accessed = int(4 * (x.size + params["wa"].size + params["ba"].size
                              + 2 * (D * S + S) + params["wp3"].size
                              + params["bp3"].size + B_pad * NOUT_PAD))

    slab = pl.pallas_call(
        kernel,
        out_shape=jax.ShapeDtypeStruct((B_pad, NOUT_PAD), jnp.float32),
        grid_spec=pltpu.PrefetchScalarGridSpec(
            num_scalar_prefetch=0,
            grid=(B_pad // TB,),
            in_specs=in_specs,
            out_specs=out_spec),
        compiler_params=pltpu.CompilerParams(
            dimension_semantics=("parallel",),
            vmem_limit_bytes=32 * 1024 * 1024),
        cost_estimate=pl.CostEstimate(flops=flops, transcendentals=0,
                                      bytes_accessed=bytes_accessed),
    )(x, params["wa"], params["ba"], params["ws2"], params["bs2"],
      params["wp2"], params["bp2"], params["wp3"], params["bp3"])

    slab = slab[:B]
    return {
        "linear": slab[:, :C],
        "shift": slab[:, C:C + 4],
        "joint": slab[:, C + 4:C + 4 + 4 * C],
        "simclr": slab[:, DIRECT:DIRECT + S],
        "score": slab[:, DIRECT + S:DIRECT + S + 1],
    }


def base_model_forward(features, params, penultimate=False, simclr=False,
                       score=False, shift=False, joint=False):
    """Mirrors BaseModel.forward (features = output of abstract penultimate())."""
    heads = _fused_heads(features, params)
    return_aux = penultimate or simclr or score or shift or joint
    if return_aux:
        aux = {}
        if penultimate:
            aux["penultimate"] = features
        if simclr:
            aux["simclr"] = heads["simclr"]
        if score:
            aux["score"] = heads["score"]
        if shift:
            aux["shift"] = heads["shift"]
        if joint:
            aux["joint"] = heads["joint"]
        return heads["linear"], aux
    return heads["score"], features


# ------------------------- pure-JAX reference check --------------------------

def _lin(x, w, b):
    return jnp.dot(x, w.T, preferred_element_type=jnp.float32) + b


def reference_heads(features, raw):
    x = features.astype(jnp.float32)
    h_s = jax.nn.relu(_lin(x, raw["w_s1"], raw["b_s1"]))
    h_p = jax.nn.relu(_lin(x, raw["w_p1"], raw["b_p1"]))
    h2 = jax.nn.relu(_lin(h_p, raw["w_p2"], raw["b_p2"]))
    return {
        "linear": _lin(x, raw["w_lin"], raw["b_lin"]),
        "shift": _lin(x, raw["w_shift"], raw["b_shift"]),
        "joint": _lin(x, raw["w_joint"], raw["b_joint"]),
        "simclr": _lin(h_s, raw["w_s2"], raw["b_s2"]),
        "score": _lin(h2, raw["w_p3"], raw["b_p3"]),
    }


# ---------------------------------- main -------------------------------------

if __name__ == "__main__":
    key = jax.random.PRNGKey(0)
    B, D, C, S = 2, 32, 10, 128            # batch, last_dim, num_classes, simclr_dim

    names_shapes = [
        ("w_lin", (C, D)), ("b_lin", (C,)),
        ("w_shift", (4, D)), ("b_shift", (4,)),
        ("w_joint", (4 * C, D)), ("b_joint", (4 * C,)),
        ("w_s1", (D, D)), ("b_s1", (D,)),
        ("w_s2", (S, D)), ("b_s2", (S,)),
        ("w_p1", (D, D)), ("b_p1", (D,)),
        ("w_p2", (S, D)), ("b_p2", (S,)),
        ("w_p3", (1, S)), ("b_p3", (1,)),
    ]
    keys = jax.random.split(key, len(names_shapes) + 1)
    raw = {name: 0.1 * jax.random.normal(k, shape, jnp.float32)
           for (name, shape), k in zip(names_shapes, keys[:-1])}
    features = jax.random.normal(keys[-1], (B, D), jnp.float32)

    params = pack_params(raw, D, C, S)
    ref = reference_heads(features, raw)

    # --- Default path: forward() with no flags -> (score_layer(features), features)
    score_out, feats_out = base_model_forward(features, params)
    score_out = jax.block_until_ready(score_out)
    assert score_out.shape == (B, 1), score_out.shape
    err = float(jnp.max(jnp.abs(score_out - ref["score"])))
    assert err < 1e-2, f"score mismatch: {err}"
    assert float(jnp.max(jnp.abs(feats_out - features))) == 0.0

    # --- Aux path: all flags set -> (linear(features), aux dict) -----------------
    out, aux = base_model_forward(features, params, penultimate=True,
                                  simclr=True, score=True, shift=True,
                                  joint=True)
    out = jax.block_until_ready(out)
    checks = [
        (out, ref["linear"]),
        (aux["penultimate"], features),
        (aux["simclr"], ref["simclr"]),
        (aux["score"], ref["score"]),
        (aux["shift"], ref["shift"]),
        (aux["joint"], ref["joint"]),
    ]
    for got, want in checks:
        e = float(jnp.max(jnp.abs(got - want)))
        assert e < 1e-2, f"head mismatch: {e}"

    print("KERNEL_OK")
</pallas_src>

<mosaic_0001>
module attributes {stable_mosaic.version = 11 : i64} {
  func.func @kernel(%arg0: i32, %arg1: memref<8x32xf32, #tpu.memory_space<vmem>>, %arg2: memref<32x128xf32, #tpu.memory_space<vmem>>, %arg3: memref<1x128xf32, #tpu.memory_space<vmem>>, %arg4: memref<32x128xf32, #tpu.memory_space<vmem>>, %arg5: memref<1x128xf32, #tpu.memory_space<vmem>>, %arg6: memref<32x128xf32, #tpu.memory_space<vmem>>, %arg7: memref<1x128xf32, #tpu.memory_space<vmem>>, %arg8: memref<128x128xf32, #tpu.memory_space<vmem>>, %arg9: memref<1x128xf32, #tpu.memory_space<vmem>>, %arg10: memref<8x256xf32, #tpu.memory_space<vmem>>) attributes {dimension_semantics = [#tpu.dimension_semantics<parallel>], iteration_bounds = array<i64: 1>, scalar_prefetch = 0 : i64, scratch_operands = 0 : i64, tpu.core_type = #tpu.core_type<tc>, window_params = [{transform_indices = @transform_0, window_bounds = array<i64: 8, 32>}, {pipeline_mode = #tpu.pipeline_mode<synchronous>, transform_indices = @transform_1, window_bounds = array<i64: 32, 128>}, {pipeline_mode = #tpu.pipeline_mode<synchronous>, transform_indices = @transform_2, window_bounds = array<i64: 1, 128>}, {pipeline_mode = #tpu.pipeline_mode<synchronous>, transform_indices = @transform_3, window_bounds = array<i64: 32, 128>}, {pipeline_mode = #tpu.pipeline_mode<synchronous>, transform_indices = @transform_4, window_bounds = array<i64: 1, 128>}, {pipeline_mode = #tpu.pipeline_mode<synchronous>, transform_indices = @transform_5, window_bounds = array<i64: 32, 128>}, {pipeline_mode = #tpu.pipeline_mode<synchronous>, transform_indices = @transform_6, window_bounds = array<i64: 1, 128>}, {pipeline_mode = #tpu.pipeline_mode<synchronous>, transform_indices = @transform_7, window_bounds = array<i64: 128, 128>}, {pipeline_mode = #tpu.pipeline_mode<synchronous>, transform_indices = @transform_8, window_bounds = array<i64: 1, 128>}, {transform_indices = @transform_9, window_bounds = array<i64: 8, 256>}]} {
    %c0 = arith.constant 0 : index
    %c0_0 = arith.constant 0 : index
    %0 = vector.load %arg1[%c0, %c0_0] : memref<8x32xf32, #tpu.memory_space<vmem>>, vector<8x32xf32>
    %c0_1 = arith.constant 0 : index
    %c0_2 = arith.constant 0 : index
    %1 = vector.load %arg2[%c0_1, %c0_2] : memref<32x128xf32, #tpu.memory_space<vmem>>, vector<32x128xf32>
    %cst = arith.constant dense<0.000000e+00> : vector<8x128xf32>
    %2 = tpu.matmul %0, %1, %cst {dimension_numbers = #tpu.dot_dimension_numbers<[1], [0], [0], [1], [0, 0, 1, 1], [], []>} : vector<8x32xf32>, vector<32x128xf32>, vector<8x128xf32> -> vector<8x128xf32>
    %c0_3 = arith.constant 0 : index
    %c0_4 = arith.constant 0 : index
    %3 = vector.load %arg3[%c0_3, %c0_4] : memref<1x128xf32, #tpu.memory_space<vmem>>, vector<1x128xf32>
    %4 = vector.broadcast %3 : vector<1x128xf32> to vector<8x128xf32>
    %5 = arith.addf %2, %4 : vector<8x128xf32>
    %6 = vector.extract_strided_slice %5 {offsets = [0, 0], sizes = [8, 54], strides = [1, 1]} : vector<8x128xf32> to vector<8x54xf32>
    %7 = vector.extract_strided_slice %5 {offsets = [0, 54], sizes = [8, 32], strides = [1, 1]} : vector<8x128xf32> to vector<8x32xf32>
    %cst_5 = arith.constant 0.000000e+00 : f32
    %8 = vector.broadcast %cst_5 : f32 to vector<8x32xf32>
    %9 = arith.maximumf %7, %8 : vector<8x32xf32>
    %10 = vector.extract_strided_slice %5 {offsets = [0, 86], sizes = [8, 32], strides = [1, 1]} : vector<8x128xf32> to vector<8x32xf32>
    %cst_6 = arith.constant 0.000000e+00 : f32
    %11 = vector.broadcast %cst_6 : f32 to vector<8x32xf32>
    %12 = arith.maximumf %10, %11 : vector<8x32xf32>
    %c0_7 = arith.constant 0 : index
    %c0_8 = arith.constant 0 : index
    %13 = vector.load %arg4[%c0_7, %c0_8] : memref<32x128xf32, #tpu.memory_space<vmem>>, vector<32x128xf32>
    %cst_9 = arith.constant dense<0.000000e+00> : vector<8x128xf32>
    %14 = tpu.matmul %9, %13, %cst_9 {dimension_numbers = #tpu.dot_dimension_numbers<[1], [0], [0], [1], [0, 0, 1, 1], [], []>} : vector<8x32xf32>, vector<32x128xf32>, vector<8x128xf32> -> vector<8x128xf32>
    %c0_10 = arith.constant 0 : index
    %c0_11 = arith.constant 0 : index
    %15 = vector.load %arg5[%c0_10, %c0_11] : memref<1x128xf32, #tpu.memory_space<vmem>>, vector<1x128xf32>
    %16 = vector.broadcast %15 : vector<1x128xf32> to vector<8x128xf32>
    %17 = arith.addf %14, %16 : vector<8x128xf32>
    %c0_12 = arith.constant 0 : index
    %c0_13 = arith.constant 0 : index
    %18 = vector.load %arg6[%c0_12, %c0_13] : memref<32x128xf32, #tpu.memory_space<vmem>>, vector<32x128xf32>
    %cst_14 = arith.constant dense<0.000000e+00> : vector<8x128xf32>
    %19 = tpu.matmul %12, %18, %cst_14 {dimension_numbers = #tpu.dot_dimension_numbers<[1], [0], [0], [1], [0, 0, 1, 1], [], []>} : vector<8x32xf32>, vector<32x128xf32>, vector<8x128xf32> -> vector<8x128xf32>
    %c0_15 = arith.constant 0 : index
    %c0_16 = arith.constant 0 : index
    %20 = vector.load %arg7[%c0_15, %c0_16] : memref<1x128xf32, #tpu.memory_space<vmem>>, vector<1x128xf32>
    %21 = vector.broadcast %20 : vector<1x128xf32> to vector<8x128xf32>
    %22 = arith.addf %19, %21 : vector<8x128xf32>
    %cst_17 = arith.constant 0.000000e+00 : f32
    %23 = vector.broadcast %cst_17 : f32 to vector<8x128xf32>
    %24 = arith.maximumf %22, %23 : vector<8x128xf32>
    %c0_18 = arith.constant 0 : index
    %c0_19 = arith.constant 0 : index
    %25 = vector.load %arg8[%c0_18, %c0_19] : memref<128x128xf32, #tpu.memory_space<vmem>>, vector<128x128xf32>
    %cst_20 = arith.constant dense<0.000000e+00> : vector<8x128xf32>
    %26 = tpu.matmul %24, %25, %cst_20 {dimension_numbers = #tpu.dot_dimension_numbers<[1], [0], [0], [1], [0, 0, 1, 1], [], []>} : vector<8x128xf32>, vector<128x128xf32>, vector<8x128xf32> -> vector<8x128xf32>
    %c0_21 = arith.constant 0 : index
    %c0_22 = arith.constant 0 : index
    %27 = vector.load %arg9[%c0_21, %c0_22] : memref<1x128xf32, #tpu.memory_space<vmem>>, vector<1x128xf32>
    %28 = vector.broadcast %27 : vector<1x128xf32> to vector<8x128xf32>
    %29 = arith.addf %26, %28 : vector<8x128xf32>
    %30 = vector.extract_strided_slice %29 {offsets = [0, 0], sizes = [8, 74], strides = [1, 1]} : vector<8x128xf32> to vector<8x74xf32>
    %31 = tpu.concatenate %6, %17, %30 in 1 : vector<8x54xf32>, vector<8x128xf32>, vector<8x74xf32> -> vector<8x256xf32>
    %c0_23 = arith.constant 0 : index
    %c0_24 = arith.constant 0 : index
    %32 = vector.load %arg10[%c0_23, %c0_24] : memref<8x256xf32, #tpu.memory_space<vmem>>, vector<8x256xf32>
    tpu.vector_store %arg10[%c0_23, %c0_24], %31 {strides = array<i32>} : memref<8x256xf32, #tpu.memory_space<vmem>>, vector<8x256xf32>,
    return
  }
  func.func @transform_0(%arg0: i32) -> (i32, i32) {
    %c0_i32 = arith.constant 0 : i32
    %c0_i32_0 = arith.constant 0 : i32
    return %arg0, %c0_i32 : i32, i32
  }
  func.func @transform_1(%arg0: i32) -> (i32, i32) {
    %c0_i32 = arith.constant 0 : i32
    %c0_i32_0 = arith.constant 0 : i32
    %c0_i32_1 = arith.constant 0 : i32
    return %c0_i32, %c0_i32_0 : i32, i32
  }
  func.func @transform_2(%arg0: i32) -> (i32, i32) {
    %c0_i32 = arith.constant 0 : i32
    %c0_i32_0 = arith.constant 0 : i32
    %c0_i32_1 = arith.constant 0 : i32
    return %c0_i32, %c0_i32_0 : i32, i32
  }
  func.func @transform_3(%arg0: i32) -> (i32, i32) {
    %c0_i32 = arith.constant 0 : i32
    %c0_i32_0 = arith.constant 0 : i32
    %c0_i32_1 = arith.constant 0 : i32
    return %c0_i32, %c0_i32_0 : i32, i32
  }
  func.func @transform_4(%arg0: i32) -> (i32, i32) {
    %c0_i32 = arith.constant 0 : i32
    %c0_i32_0 = arith.constant 0 : i32
    %c0_i32_1 = arith.constant 0 : i32
    return %c0_i32, %c0_i32_0 : i32, i32
  }
  func.func @transform_5(%arg0: i32) -> (i32, i32) {
    %c0_i32 = arith.constant 0 : i32
    %c0_i32_0 = arith.constant 0 : i32
    %c0_i32_1 = arith.constant 0 : i32
    return %c0_i32, %c0_i32_0 : i32, i32
  }
  func.func @transform_6(%arg0: i32) -> (i32, i32) {
    %c0_i32 = arith.constant 0 : i32
    %c0_i32_0 = arith.constant 0 : i32
    %c0_i32_1 = arith.constant 0 : i32
    return %c0_i32, %c0_i32_0 : i32, i32
  }
  func.func @transform_7(%arg0: i32) -> (i32, i32) {
    %c0_i32 = arith.constant 0 : i32
    %c0_i32_0 = arith.constant 0 : i32
    %c0_i32_1 = arith.constant 0 : i32
    return %c0_i32, %c0_i32_0 : i32, i32
  }
  func.func @transform_8(%arg0: i32) -> (i32, i32) {
    %c0_i32 = arith.constant 0 : i32
    %c0_i32_0 = arith.constant 0 : i32
    %c0_i32_1 = arith.constant 0 : i32
    return %c0_i32, %c0_i32_0 : i32, i32
  }
  func.func @transform_9(%arg0: i32) -> (i32, i32) {
    %c0_i32 = arith.constant 0 : i32
    %c0_i32_0 = arith.constant 0 : i32
    return %arg0, %c0_i32 : i32, i32
  }
}

</mosaic_0001>

<llo_original>
// kernel: tpu_custom_call.1
$region0: #{tpu_custom_call.1}
  #allocation0 [shape = 'u32[]', space=smem, size = 0x4, offset = 0x4, fixed_abs, tag = 'smem constant byte address 0x4 - core index']
  #allocation1 [shape = 'u32[72,128]{1,0:T(1,128)}', space=vmem, size = 0x9000, scoped, tag = 'internal scratch']
  %s0 = inlined_call_operand.hbm [shape: f32[8,32], index: 0, kind: input, shape index: {}]
  %s1 = inlined_call_operand.hbm [shape: f32[32,128], index: 1, kind: input, shape index: {}]
  %s2 = inlined_call_operand.vmem [shape: f32[1,128], index: 2, kind: input, shape index: {}]
  %s3 = inlined_call_operand.hbm [shape: f32[32,128], index: 3, kind: input, shape index: {}]
  %s4 = inlined_call_operand.vmem [shape: f32[1,128], index: 4, kind: input, shape index: {}]
  %s5 = inlined_call_operand.hbm [shape: f32[32,128], index: 5, kind: input, shape index: {}]
  %s6 = inlined_call_operand.vmem [shape: f32[1,128], index: 6, kind: input, shape index: {}]
  %s7 = inlined_call_operand.hbm [shape: f32[128,128], index: 7, kind: input, shape index: {}]
  %s8 = inlined_call_operand.vmem [shape: f32[1,128], index: 8, kind: input, shape index: {}]
  %s9 = inlined_call_operand.hbm [shape: f32[8,256], index: 9, kind: output, shape index: {}]
  %s10 = sld [smem:[#allocation0]]
  $region66: #{tpu_custom_call.1} parent=0
    _
  %s12 = ssub.s32 1, %s10
  %s13 = scalar_select 0, %s12, %s10
  $region1: #{tpu_custom_call.1} parent=0
    #allocation2 [shape = 'u8[4096]{0}', space=vmem, size = 0x1000, scoped, tag = 'input window, operand 0, single buffered']
    #allocation3 [shape = 's32[1]{0}', space=sflag, size = 0x4, scoped, tag = 'scoped memory for tpu_custom_call.1']
    #allocation4 [shape = 's32[1]{0}', space=sflag, size = 0x4, scoped, tag = 'scoped memory for tpu_custom_call.1']
    #allocation5 [shape = 'u8[16384]{0}', space=vmem, size = 0x4000, scoped, tag = 'input window, operand 1, single buffered']
    #allocation6 [shape = 's32[1]{0}', space=sflag, size = 0x4, scoped, tag = 'scoped memory for tpu_custom_call.1']
    #allocation7 [shape = 'u8[16384]{0}', space=vmem, size = 0x4000, scoped, tag = 'input window, operand 3, single buffered']
    #allocation8 [shape = 'u8[16384]{0}', space=vmem, size = 0x4000, scoped, tag = 'input window, operand 5, single buffered']
    #allocation9 [shape = 's32[1]{0}', space=sflag, size = 0x4, scoped, tag = 'scoped memory for tpu_custom_call.1']
    #allocation10 [shape = 'u8[65536]{0}', space=vmem, size = 0x10000, scoped, tag = 'input window, operand 7, single buffered']
    #allocation11 [shape = 'u8[8192]{0}', space=vmem, size = 0x2000, scoped, tag = 'output window, operand 0, single buffered']
    %14 = vsyncpa [#allocation3], 0
    %15 = vsyncpa [#allocation6], 0
    %16 = vsyncpa [#allocation9], 0
    %17 = vsyncpa [#allocation4], 0
    // Predicated region
    $region2: #{tpu_custom_call.1} parent=1 // pred_check
      _
    $region3: #{tpu_custom_call.1} parent=1 // pred_check_branch
      %19 = sbr.rel (0) target = $region5
    $region4: #{tpu_custom_call.1} parent=1 // pred_region
      %21 = vsyncadd [#allocation3], 0
      %s23 = sshll.u32 %s0, 4
      %s24 = int_to_ptr.hbm [resolvable:$true] %s23
      %s25 = sshll.u32 [#allocation2], 4
      %s26 = int_to_ptr.vmem [resolvable:$true] %s25
      %28 = dma.hbm_to_vmem [thread:$0]  %s24, 128, %s26, [#allocation3]
    $region5: #{tpu_custom_call.1} parent=1 // pred_fallthru
      _
    // Predicated region
    $region6: #{tpu_custom_call.1} parent=1 // pred_check
      _
    $region7: #{tpu_custom_call.1} parent=1 // pred_check_branch
      %30 = sbr.rel (0) target = $region9
    $region8: #{tpu_custom_call.1} parent=1 // pred_region
      %32 = vsyncadd [#allocation6], 0
      %s33 = sshll.u32 %s1, 4
      %s34 = int_to_ptr.hbm [resolvable:$true] %s33
      %s35 = sshll.u32 [#allocation5], 4
      %s36 = int_to_ptr.vmem [resolvable:$true] %s35
      %41 = dma.hbm_to_vmem [thread:$0]  %s34, 512, %s36, [#allocation6], 128, 128, 8
    $region9: #{tpu_custom_call.1} parent=1 // pred_fallthru
      _
    // Predicated region
    $region10: #{tpu_custom_call.1} parent=1 // pred_check
      _
    $region11: #{tpu_custom_call.1} parent=1 // pred_check_branch
      %43 = sbr.rel (0) target = $region13
    $region12: #{tpu_custom_call.1} parent=1 // pred_region
      _
    $region13: #{tpu_custom_call.1} parent=1 // pred_fallthru
      _
    // Predicated region
    $region14: #{tpu_custom_call.1} parent=1 // pred_check
      _
    $region15: #{tpu_custom_call.1} parent=1 // pred_check_branch
      %45 = sbr.rel (0) target = $region17
    $region16: #{tpu_custom_call.1} parent=1 // pred_region
      %47 = vsyncadd [#allocation6], 0
      %s48 = sshll.u32 %s3, 4
      %s49 = int_to_ptr.hbm [resolvable:$true] %s48
      %s50 = sshll.u32 [#allocation7], 4
      %s51 = int_to_ptr.vmem [resolvable:$true] %s50
      %56 = dma.hbm_to_vmem [thread:$0]  %s49, 512, %s51, [#allocation6], 128, 128, 8
    $region17: #{tpu_custom_call.1} parent=1 // pred_fallthru
      _
    // Predicated region
    $region18: #{tpu_custom_call.1} parent=1 // pred_check
      _
    $region19: #{tpu_custom_call.1} parent=1 // pred_check_branch
      %58 = sbr.rel (0) target = $region21
    $region20: #{tpu_custom_call.1} parent=1 // pred_region
      _
    $region21: #{tpu_custom_call.1} parent=1 // pred_fallthru
      _
    // Predicated region
    $region22: #{tpu_custom_call.1} parent=1 // pred_check
      _
    $region23: #{tpu_custom_call.1} parent=1 // pred_check_branch
      %60 = sbr.rel (0) target = $region25
    $region24: #{tpu_custom_call.1} parent=1 // pred_region
      %62 = vsyncadd [#allocation9], 0
      %s63 = sshll.u32 %s5, 4
      %s64 = int_to_ptr.hbm [resolvable:$true] %s63
      %s65 = sshll.u32 [#allocation8], 4
      %s66 = int_to_ptr.vmem [resolvable:$true] %s65
      %71 = dma.hbm_to_vmem [thread:$0]  %s64, 512, %s66, [#allocation9], 128, 128, 8
    $region25: #{tpu_custom_call.1} parent=1 // pred_fallthru
      _
    // Predicated region
    $region26: #{tpu_custom_call.1} parent=1 // pred_check
      _
    $region27: #{tpu_custom_call.1} parent=1 // pred_check_branch
      %73 = sbr.rel (0) target = $region29
    $region28: #{tpu_custom_call.1} parent=1 // pred_region
      _
    $region29: #{tpu_custom_call.1} parent=1 // pred_fallthru
      _
    // Predicated region
    $region30: #{tpu_custom_call.1} parent=1 // pred_check
      _
    $region31: #{tpu_custom_call.1} parent=1 // pred_check_branch
      %75 = sbr.rel (0) target = $region33
    $region32: #{tpu_custom_call.1} parent=1 // pred_region
      %77 = vsyncadd [#allocation9], 0
      %s78 = sshll.u32 %s7, 4
      %s79 = int_to_ptr.hbm [resolvable:$true] %s78
      %s80 = sshll.u32 [#allocation10], 4
      %s81 = int_to_ptr.vmem [resolvable:$true] %s80
      %86 = dma.hbm_to_vmem [thread:$0]  %s79, 2048, %s81, [#allocation9], 128, 128, 8
    $region33: #{tpu_custom_call.1} parent=1 // pred_fallthru
      _
    // Predicated region
    $region34: #{tpu_custom_call.1} parent=1 // pred_check
      _
    $region35: #{tpu_custom_call.1} parent=1 // pred_check_branch
      %88 = sbr.rel (0) target = $region37
    $region36: #{tpu_custom_call.1} parent=1 // pred_region
      _
    $region37: #{tpu_custom_call.1} parent=1 // pred_fallthru
      _
    // Predicated region
    $region38: #{tpu_custom_call.1} parent=1 // pred_check
      _
    $region39: #{tpu_custom_call.1} parent=1 // pred_check_branch
      %90 = sbr.rel (0) target = $region41
    $region40: #{tpu_custom_call.1} parent=1 // pred_region
      %92 = dma.done [#allocation3], 128
    $region41: #{tpu_custom_call.1} parent=1 // pred_fallthru
      _
    // Predicated region
    $region42: #{tpu_custom_call.1} parent=1 // pred_check
      _
    $region43: #{tpu_custom_call.1} parent=1 // pred_check_branch
      %94 = sbr.rel (0) target = $region45
    $region44: #{tpu_custom_call.1} parent=1 // pred_region
      %96 = dma.done [#allocation6], 512
    $region45: #{tpu_custom_call.1} parent=1 // pred_fallthru
      _
    // Predicated region
    $region46: #{tpu_custom_call.1} parent=1 // pred_check
      _
    $region47: #{tpu_custom_call.1} parent=1 // pred_check_branch
      %98 = sbr.rel (0) target = $region49
    $region48: #{tpu_custom_call.1} parent=1 // pred_region
      %100 = dma.done [#allocation6], 512
    $region49: #{tpu_custom_call.1} parent=1 // pred_fallthru
      _
    // Predicated region
    $region50: #{tpu_custom_call.1} parent=1 // pred_check
      _
    $region51: #{tpu_custom_call.1} parent=1 // pred_check_branch
      %102 = sbr.rel (0) target = $region53
    $region52: #{tpu_custom_call.1} parent=1 // pred_region
      %104 = dma.done [#allocation9], 512
    $region53: #{tpu_custom_call.1} parent=1 // pred_fallthru
      _
    // Predicated region
    $region54: #{tpu_custom_call.1} parent=1 // pred_check
      _
    $region55: #{tpu_custom_call.1} parent=1 // pred_check_branch
      %106 = sbr.rel (0) target = $region57
    $region56: #{tpu_custom_call.1} parent=1 // pred_region
      %108 = dma.done [#allocation9], 2048
    $region57: #{tpu_custom_call.1} parent=1 // pred_fallthru
      _
    %v109 = vld [vmem:[#allocation2] sm:$0xff]
    %v110 = vld [vmem:[#allocation5] sm:$0xff]
    %v111 = vld [vmem:[#allocation5 + $0x8] sm:$0xff]
    %v112 = vld [vmem:[#allocation5 + $0x10] sm:$0xff]
    %v113 = vld [vmem:[#allocation5 + $0x18] sm:$0xff]
    %v114 = vld [vmem:[%s2] sm:$0x1]
    %v116 = vperm.slane %v114, 0
    %vm118 = vcmask 261120
    %v120 = vsel %vm118, %v109, 0
    %122 = vmatpush.msra.mxu0 0.0
    %123 = vmatpush.msra.mxu0 0.0
    %124 = vmatpush.msra.mxu0 0.0
    %125 = vmatpush.msra.mxu0 0.0
    %126 = vmatpush.msra.mxu0 0.0
    %127 = vmatpush.msra.mxu0 0.0
    %128 = vmatpush.msra.mxu0 0.0
    %129 = vmatpush.msra.mxu0 0.0
    %130 = vmatpush.msra.mxu0 0.0
    %131 = vmatpush.msra.mxu0 0.0
    %132 = vmatpush.msra.mxu0 0.0
    %133 = vmatpush.msra.mxu0 0.0
    %134 = vmatpush.msra.mxu0 %v113
    %135 = vmatpush.msra.mxu0 %v112
    %136 = vmatpush.msra.mxu0 %v111
    %137 = vmatpush.msra.mxu0 %v110
    %138 = vmatmul.f32.gmra.mxu0 %v120
    %v139 = vpop.f32.mrf.mxu0
    %v140 = vadd.f32 %v116, %v139
    %141 = vdwg.mxu0
    %v142 = vmax.f32 %v140, 0.0
    %v143 = vld [vmem:[#allocation7] sm:$0xff]
    %v144 = vld [vmem:[#allocation7 + $0x8] sm:$0xff]
    %v145 = vld [vmem:[#allocation7 + $0x10] sm:$0xff]
    %v146 = vld [vmem:[#allocation7 + $0x18] sm:$0xff]
    %v147 = vld [vmem:[%s4] sm:$0x1]
    %v149 = vperm.slane %v147, 0
    %152 = vrot.lane.b32.xlu0 %v142, 74
    %v153 = vpop.permute.xlu0 %152
    %v154 = vsel %vm118, %v153, 0
    %156 = vmatpush.msra.mxu0 0.0
    %157 = vmatpush.msra.mxu0 0.0
    %158 = vmatpush.msra.mxu0 0.0
    %159 = vmatpush.msra.mxu0 0.0
    %160 = vmatpush.msra.mxu0 0.0
    %161 = vmatpush.msra.mxu0 0.0
    %162 = vmatpush.msra.mxu0 0.0
    %163 = vmatpush.msra.mxu0 0.0
    %164 = vmatpush.msra.mxu0 0.0
    %165 = vmatpush.msra.mxu0 0.0
    %166 = vmatpush.msra.mxu0 0.0
    %167 = vmatpush.msra.mxu0 0.0
    %168 = vmatpush.msra.mxu0 %v146
    %169 = vmatpush.msra.mxu0 %v145
    %170 = vmatpush.msra.mxu0 %v144
    %171 = vmatpush.msra.mxu0 %v143
    %172 = vmatmul.f32.gmra.mxu0 %v154
    %v173 = vpop.f32.mrf.mxu0
    %v174 = vadd.f32 %v149, %v173
    %175 = vdwg.mxu0
    %v176 = vld [vmem:[#allocation8] sm:$0xff]
    %v177 = vld [vmem:[#allocation8 + $0x8] sm:$0xff]
    %v178 = vld [vmem:[#allocation8 + $0x10] sm:$0xff]
    %v179 = vld [vmem:[#allocation8 + $0x18] sm:$0xff]
    %v180 = vld [vmem:[%s6] sm:$0x1]
    %v182 = vperm.slane %v180, 0
    %184 = vrot.lane.b32.xlu0 %v142, 42
    %v185 = vpop.permute.xlu0 %184
    %v186 = vsel %vm118, %v185, 0
    %188 = vmatpush.msra.mxu0 0.0
    %189 = vmatpush.msra.mxu0 0.0
    %190 = vmatpush.msra.mxu0 0.0
    %191 = vmatpush.msra.mxu0 0.0
    %192 = vmatpush.msra.mxu0 0.0
    %193 = vmatpush.msra.mxu0 0.0
    %194 = vmatpush.msra.mxu0 0.0
    %195 = vmatpush.msra.mxu0 0.0
    %196 = vmatpush.msra.mxu0 0.0
    %197 = vmatpush.msra.mxu0 0.0
    %198 = vmatpush.msra.mxu0 0.0
    %199 = vmatpush.msra.mxu0 0.0
    %200 = vmatpush.msra.mxu0 %v179
    %201 = vmatpush.msra.mxu0 %v178
    %202 = vmatpush.msra.mxu0 %v177
    %203 = vmatpush.msra.mxu0 %v176
    %204 = vmatmul.f32.gmra.mxu0 %v186
    %v205 = vpop.f32.mrf.mxu0
    %v206 = vadd.f32 %v182, %v205
    %207 = vdwg.mxu0
    %v208 = vmax.f32 %v206, 0.0
    %v209 = vld [vmem:[#allocation10] sm:$0xff]
    %v210 = vld [vmem:[#allocation10 + $0x8] sm:$0xff]
    %v211 = vld [vmem:[#allocation10 + $0x10] sm:$0xff]
    %v212 = vld [vmem:[#allocation10 + $0x18] sm:$0xff]
    %v213 = vld [vmem:[#allocation10 + $0x20] sm:$0xff]
    %v214 = vld [vmem:[#allocation10 + $0x28] sm:$0xff]
    %v215 = vld [vmem:[#allocation10 + $0x30] sm:$0xff]
    %v216 = vld [vmem:[#allocation10 + $0x38] sm:$0xff]
    %v217 = vld [vmem:[#allocation10 + $0x40] sm:$0xff]
    %v218 = vld [vmem:[#allocation10 + $0x48] sm:$0xff]
    %v219 = vld [vmem:[#allocation10 + $0x50] sm:$0xff]
    %v220 = vld [vmem:[#allocation10 + $0x58] sm:$0xff]
    %v221 = vld [vmem:[#allocation10 + $0x60] sm:$0xff]
    %v222 = vld [vmem:[#allocation10 + $0x68] sm:$0xff]
    %v223 = vld [vmem:[#allocation10 + $0x70] sm:$0xff]
    %v224 = vld [vmem:[#allocation10 + $0x78] sm:$0xff]
    %v225 = vld [vmem:[%s8] sm:$0x1]
    %v227 = vperm.slane %v225, 0
    %229 = vmatpush.msra.mxu0 %v224
    %230 = vmatpush.msra.mxu0 %v223
    %231 = vmatpush.msra.mxu0 %v222
    %232 = vmatpush.msra.mxu0 %v221
    %233 = vmatpush.msra.mxu0 %v220
    %234 = vmatpush.msra.mxu0 %v219
    %235 = vmatpush.msra.mxu0 %v218
    %236 = vmatpush.msra.mxu0 %v217
    %237 = vmatpush.msra.mxu0 %v216
    %238 = vmatpush.msra.mxu0 %v215
    %239 = vmatpush.msra.mxu0 %v214
    %240 = vmatpush.msra.mxu0 %v213
    %241 = vmatpush.msra.mxu0 %v212
    %242 = vmatpush.msra.mxu0 %v211
    %243 = vmatpush.msra.mxu0 %v210
    %244 = vmatpush.msra.mxu0 %v209
    %245 = vmatmul.f32.gmra.mxu0 %v208
    %v246 = vpop.f32.mrf.mxu0
    %v247 = vadd.f32 %v227, %v246
    %248 = vdwg.mxu0
    %250 = vrot.lane.b32.xlu0 %v174, 54
    %v251 = vpop.permute.xlu0 %250
    %254 = vrot.lane.b32.xlu0 %v247, 54
    %v255 = vpop.permute.xlu0 %254
    %vm257 = vcmask 441344
    %v258 = vsel %vm257, %v140, %v251
    %v259 = vsel %vm257, %v251, %v255
    %260 = vst [vmem:[#allocation11] sm:$0xff] %v258
    %261 = vst [vmem:[#allocation11 + $0x8] sm:$0xff] %v259
    // Predicated region
    $region58: #{tpu_custom_call.1} parent=1 // pred_check
      _
    $region59: #{tpu_custom_call.1} parent=1 // pred_check_branch
      %263 = sbr.rel (0) target = $region61
    $region60: #{tpu_custom_call.1} parent=1 // pred_region
      %265 = vsyncadd [#allocation4], 0
      %s267 = sshll.u32 [#allocation11], 4
      %s268 = int_to_ptr.vmem [resolvable:$true] %s267
      %s269 = sshll.u32 %s9, 4
      %s270 = int_to_ptr.hbm [resolvable:$true] %s269
      %272 = dma.vmem_to_hbm [thread:$0]  %s268, 256, %s270, [#allocation4]
    $region61: #{tpu_custom_call.1} parent=1 // pred_fallthru
      _
    // Predicated region
    $region62: #{tpu_custom_call.1} parent=1 // pred_check
      _
    $region63: #{tpu_custom_call.1} parent=1 // pred_check_branch
      %274 = sbr.rel (0) target = $region65
    $region64: #{tpu_custom_call.1} parent=1 // pred_region
      %276 = dma.done [#allocation4], 256
    $region65: #{tpu_custom_call.1} parent=1 // pred_fallthru
      _
    %277 = vsyncpa [#allocation3], 1
    %278 = vsyncpa [#allocation6], 1
    %279 = vsyncpa [#allocation9], 1
    %280 = vsyncpa [#allocation4], 1

</llo_original>
